<compile_context>
chip_gen: v5e
topology: v5e:2x2
jax: 0.10.0
libtpu: 0.0.40
codegen_flags: <defaults>
</compile_context>

<pallas_src>
import functools

import jax
import jax.numpy as jnp
from jax.experimental import pallas as pl
from jax.experimental.pallas import tpu as pltpu


# --------------------------------------------------------------------------- #
# Kernel
# --------------------------------------------------------------------------- #
def _ffn_kernel(x_ref, wgu_ref, wd_ref, o_ref, acc_ref, *, ti):
    # Grid: (c = core split, i = token tile, j = intermediate tile).
    # x_ref  : (tm, H)      token tile (block constant across the I axis)
    # wgu_ref: (H, 2*ti)    fused [gate_j | up_j] weight slice
    # wd_ref : (ti, H)      down-proj weight slice
    # o_ref  : (tm, H)      output tile (block constant across the I axis)
    # acc_ref: (tm, H) f32  accumulator scratch, persists across the I axis
    j = pl.program_id(2)

    @pl.when(j == 0)
    def _():
        acc_ref[...] = jnp.zeros_like(acc_ref)

    x = x_ref[...]
    # One fused MXU push serves both the gate and up projections (f32 acc).
    gu = jnp.dot(x, wgu_ref[...], preferred_element_type=jnp.float32)
    g = gu[:, :ti]          # static, lane-aligned split (ti % 128 == 0 or ti == I)
    u = gu[:, ti:]
    # SiLU(g) * u in f32 (VPU + EUP sigmoid), hidden under the MXU work.
    h = (g * jax.nn.sigmoid(g)) * u
    # Partial down projection for this I tile, accumulated in f32.
    acc_ref[...] += jnp.dot(
        h.astype(wd_ref.dtype), wd_ref[...], preferred_element_type=jnp.float32
    )

    @pl.when(j == pl.num_programs(2) - 1)
    def _():
        o_ref[...] = acc_ref[...].astype(o_ref.dtype)


# --------------------------------------------------------------------------- #
# Tiling / budgeting helpers
# --------------------------------------------------------------------------- #
def _round_up(a: int, b: int) -> int:
    return (a + b - 1) // b * b


def _device_kind() -> str:
    try:
        return jax.devices()[0].device_kind.lower()
    except Exception:
        return ""


def _vmem_capacity_bytes() -> int:
    try:
        cap = int(pltpu.get_tpu_info().vmem_capacity_bytes)
        if cap > 0:
            return cap
    except Exception:
        pass
    kind = _device_kind()
    if "v7" in kind:
        return 64 * 2**20
    if "v4" in kind or "v5" in kind or "v6" in kind:
        return 128 * 2**20
    return 64 * 2**20  # conservative for unknown chips


def _default_tiles(kind: str):
    if "v7" in kind:
        return 512, 256
    if "v6" in kind:
        return 1024, 512
    if "v5" in kind or "v4" in kind:
        return 512, 512
    return 512, 256


def _pick_ti(I: int, ti_req: int):
    """Largest lane-aligned (mult of 128) tile <= ti_req dividing I; else pad I."""
    ti_req = max(128, ti_req // 128 * 128)
    if I <= ti_req:
        return I, I                       # single tile, block == full dim
    d = ti_req
    while d >= 128:
        if I % d == 0:
            return d, I                   # exact divisor, no padding
        d -= 128
    ti = min(ti_req, 512)                 # no lane-aligned divisor: zero-pad I
    return ti, _round_up(I, ti)


def _vmem_estimate(tm, ti, H, act_bytes, w_bytes, out_bytes):
    return int(
        2 * (tm * H * act_bytes           # x tile (double-buffered)
             + H * (2 * ti) * w_bytes     # fused gate|up weight tile
             + ti * H * w_bytes           # down-proj weight tile
             + tm * H * out_bytes)        # output tile
        + tm * H * 4                      # f32 accumulator scratch
        + tm * (2 * ti) * 4               # gu f32 MXU result
        + tm * ti * 4                     # h = silu(g)*u in f32
        + tm * ti * w_bytes               # h cast to weight dtype
    )


# --------------------------------------------------------------------------- #
# Wrapper
# --------------------------------------------------------------------------- #
def ffn_pallas(x, w_gate_t, w_up_t, w_down_t, *, tm=None, ti=None,
               num_core_splits=None, vmem_limit_bytes=None):
    """SwiGLU FFN: down( SiLU(x @ Wg) * (x @ Wu) ).

    x        : (batch, seq, hidden)
    w_gate_t : (hidden, intermediate)   (= nn.Linear gate_proj.weight.T)
    w_up_t   : (hidden, intermediate)
    w_down_t : (intermediate, hidden)
    tm / ti  : token / intermediate tile; None -> per-generation defaults.
    num_core_splits : split the I axis across N parallel grid slots (decode on
                      multi-TensorCore chips); None -> auto.
    """
    B, S, H = x.shape
    I = w_gate_t.shape[1]
    assert w_up_t.shape == (H, I) and w_down_t.shape == (I, H)
    T = B * S

    kind = _device_kind()
    tm_def, ti_def = _default_tiles(kind)
    if tm is None:
        tm = tm_def
    if ti is None:
        ti = ti_def
        if T <= 64:
            # Decode regime: x/out/acc tiles are tiny, so spend VMEM on longer
            # weight DMAs and fewer grid steps.
            ti = max(ti, 1024 if "v7" in kind else 2048)

    # Token tile: multiple of 16 (bf16 sublane packing), clamped to T.
    tm_eff = min(max(16, tm // 16 * 16), _round_up(T, 16))

    # Decode on a 2-TensorCore chip: a single token tile can't feed both
    # cores, so split the weight stream (I axis) across a parallel axis.
    n_split = num_core_splits
    if n_split is None:
        n_split = 2 if ("v7" in kind and _round_up(T, tm_eff) == tm_eff) else 1
    n_split = max(1, int(n_split))

    xb = jnp.dtype(x.dtype).itemsize
    wb = jnp.dtype(w_gate_t.dtype).itemsize
    cap = max(_vmem_capacity_bytes() - 4 * 2**20, 16 * 2**20)

    # Shrink (ti first, then tm) until double-buffered tiles + f32 temporaries
    # fit the per-core VMEM budget.
    ti_req = ti
    while True:
        ti_eff, I_pad = _pick_ti(I, ti_req)
        n_i_total = I_pad // ti_eff
        ns = min(n_split, n_i_total)
        if n_i_total % ns != 0:
            n_i_total = _round_up(n_i_total, ns)
            I_pad = n_i_total * ti_eff
        ob = 4 if ns > 1 else xb
        est = _vmem_estimate(tm_eff, ti_eff, H, xb, wb, ob)
        if est <= cap or (ti_eff <= 128 and tm_eff <= 16):
            break
        if ti_eff > 128:
            ti_req = max(128, ti_eff // 2)
        else:
            tm_eff = max(16, tm_eff // 2 // 16 * 16)

    n_i_per_split = n_i_total // ns
    T_pad = _round_up(T, tm_eff)
    n_tok = T_pad // tm_eff

    # ---- pad activations / weights (exact: padded tokens are sliced off,
    # padded I columns give silu(0)*0 == 0 against zero down-proj rows).
    x2 = x.reshape(T, H)
    if T_pad != T:
        x2 = jnp.pad(x2, ((0, T_pad - T), (0, 0)))
    wg, wu, wd = w_gate_t, w_up_t, w_down_t
    if I_pad != I:
        wg = jnp.pad(wg, ((0, 0), (0, I_pad - I)))
        wu = jnp.pad(wu, ((0, 0), (0, I_pad - I)))
        wd = jnp.pad(wd, ((0, I_pad - I), (0, 0)))

    # ---- fuse gate & up: tile j of width 2*ti holds [gate_j | up_j] so one
    # BlockSpec / one DMA stream / one MXU push serves both projections.
    w_gu = jnp.concatenate(
        [wg.reshape(H, n_i_total, ti_eff), wu.reshape(H, n_i_total, ti_eff)],
        axis=2,
    ).reshape(H, 2 * I_pad)

    out_dtype = jnp.float32 if ns > 1 else x.dtype
    ob = jnp.dtype(out_dtype).itemsize

    if vmem_limit_bytes is None:
        est = _vmem_estimate(tm_eff, ti_eff, H, xb, wb, ob)
        vmem_limit_bytes = int(min(max(int(est * 1.4), 32 * 2**20), cap))

    cost = pl.CostEstimate(
        flops=6 * T_pad * H * I_pad,
        transcendentals=T_pad * I_pad,
        bytes_accessed=int((w_gu.size + wd.size) * wb * n_tok
                           + x2.size * xb * ns + ns * T_pad * H * ob),
    )

    grid = (ns, n_tok, n_i_per_split)

    out2 = pl.pallas_call(
        functools.partial(_ffn_kernel, ti=ti_eff),
        out_shape=jax.ShapeDtypeStruct((ns * T_pad, H), out_dtype),
        grid_spec=pltpu.PrefetchScalarGridSpec(
            num_scalar_prefetch=0,
            grid=grid,
            in_specs=[
                # x token tile: block constant across (c, j) -> not re-DMA'd.
                pl.BlockSpec((tm_eff, H), lambda c, i, j: (i, 0)),
                # fused [gate|up] slice: marches along this split's I range.
                pl.BlockSpec((H, 2 * ti_eff),
                             lambda c, i, j: (0, c * n_i_per_split + j)),
                # down-proj slice: same I tile, as rows.
                pl.BlockSpec((ti_eff, H),
                             lambda c, i, j: (c * n_i_per_split + j, 0)),
            ],
            # Output block index constant across the reduction axis j, so it
            # stays resident while the f32 accumulator fills.
            out_specs=pl.BlockSpec((tm_eff, H),
                                   lambda c, i, j: (c * n_tok + i, 0)),
            scratch_shapes=[pltpu.VMEM((tm_eff, H), jnp.float32)],
        ),
        compiler_params=pltpu.CompilerParams(
            dimension_semantics=("parallel", "parallel", "arbitrary"),
            vmem_limit_bytes=vmem_limit_bytes,
        ),
        cost_estimate=cost,
    )(x2, w_gu, wd)

    if ns > 1:
        out2 = out2.reshape(ns, T_pad, H).sum(axis=0)
    return out2[:T].astype(x.dtype).reshape(B, S, H)


def ffn_reference(x, w_gate_t, w_up_t, w_down_t):
    """f32 reference mirroring the kernel's precision path (bf16 h cast)."""
    xf = x.astype(jnp.float32)
    g = xf @ w_gate_t.astype(jnp.float32)
    u = xf @ w_up_t.astype(jnp.float32)
    h = (jax.nn.silu(g) * u).astype(w_down_t.dtype).astype(jnp.float32)
    return h @ w_down_t.astype(jnp.float32)


# --------------------------------------------------------------------------- #
# Self-test
# --------------------------------------------------------------------------- #
if __name__ == "__main__":
    dtype = jnp.bfloat16
    key = jax.random.PRNGKey(0)

    def make_case(k, batch, seq, hidden, inter):
        kx, kg, ku, kd = jax.random.split(k, 4)
        x = jax.random.normal(kx, (batch, seq, hidden), jnp.float32).astype(dtype)
        # nn.Linear weight shapes: gate/up (I, H), down (H, I); pass transposes.
        w_gate = jax.random.normal(kg, (inter, hidden), jnp.float32) * 0.05
        w_up = jax.random.normal(ku, (inter, hidden), jnp.float32) * 0.05
        w_down = jax.random.normal(kd, (hidden, inter), jnp.float32) * 0.05
        return (x, w_gate.T.astype(dtype), w_up.T.astype(dtype),
                w_down.T.astype(dtype))

    k1, k2 = jax.random.split(key)

    # Case 1: prefill-like — multiple token tiles with ragged T (padding path)
    # and multiple I tiles (accumulator init/writeback across the reduction).
    x, wg, wu, wd = make_case(k1, batch=2, seq=21, hidden=64, inter=256)
    out = jax.block_until_ready(ffn_pallas(x, wg, wu, wd, tm=16, ti=128))
    ref = ffn_reference(x, wg, wu, wd)
    assert out.shape == x.shape and out.dtype == x.dtype
    err1 = jnp.max(jnp.abs(out.astype(jnp.float32) - ref))
    assert err1 < 2e-2, f"case1 mismatch vs reference: max abs err {err1}"

    # Case 2: decode-like — single token, dual-core I split (f32 partial
    # outputs combined by one XLA add).
    x, wg, wu, wd = make_case(k2, batch=1, seq=1, hidden=64, inter=256)
    out = jax.block_until_ready(
        ffn_pallas(x, wg, wu, wd, ti=128, num_core_splits=2))
    ref = ffn_reference(x, wg, wu, wd)
    assert out.shape == x.shape and out.dtype == x.dtype
    err2 = jnp.max(jnp.abs(out.astype(jnp.float32) - ref))
    assert err2 < 2e-2, f"case2 mismatch vs reference: max abs err {err2}"

    print("KERNEL_OK")
</pallas_src>

<mosaic_0001>
module attributes {stable_mosaic.version = 11 : i64} {
  func.func @_ffn_kernel(%arg0: i32, %arg1: i32, %arg2: i32, %arg3: memref<16x64xbf16, #tpu.memory_space<vmem>>, %arg4: memref<64x256xbf16, #tpu.memory_space<vmem>>, %arg5: memref<128x64xbf16, #tpu.memory_space<vmem>>, %arg6: memref<16x64xbf16, #tpu.memory_space<vmem>>, %arg7: memref<16x64xf32, #tpu.memory_space<vmem>>) attributes {dimension_semantics = [#tpu.dimension_semantics<parallel>, #tpu.dimension_semantics<parallel>, #tpu.dimension_semantics<arbitrary>], iteration_bounds = array<i64: 1, 3, 2>, scalar_prefetch = 0 : i64, scratch_operands = 1 : i64, tpu.core_type = #tpu.core_type<tc>, window_params = [{transform_indices = @transform_0, window_bounds = array<i64: 16, 64>}, {transform_indices = @transform_1, window_bounds = array<i64: 64, 256>}, {transform_indices = @transform_2, window_bounds = array<i64: 128, 64>}, {transform_indices = @transform_3, window_bounds = array<i64: 16, 64>}]} {
    %c0_i32 = arith.constant 0 : i32
    %0 = arith.cmpi eq, %arg2, %c0_i32 : i32
    %1 = arith.extui %0 : i1 to i32
    %c0_i32_0 = arith.constant 0 : i32
    %2 = arith.cmpi ne, %1, %c0_i32_0 : i32
    scf.if %2 {
      %cst_13 = arith.constant 0.000000e+00 : f32
      %24 = vector.broadcast %cst_13 : f32 to vector<16x64xf32>
      %c0_14 = arith.constant 0 : index
      %c0_15 = arith.constant 0 : index
      %25 = vector.load %arg7[%c0_14, %c0_15] : memref<16x64xf32, #tpu.memory_space<vmem>>, vector<16x64xf32>
      tpu.vector_store %arg7[%c0_14, %c0_15], %24 {strides = array<i32>} : memref<16x64xf32, #tpu.memory_space<vmem>>, vector<16x64xf32>,
    } else {
    }
    %c0 = arith.constant 0 : index
    %c0_1 = arith.constant 0 : index
    %3 = vector.load %arg3[%c0, %c0_1] : memref<16x64xbf16, #tpu.memory_space<vmem>>, vector<16x64xbf16>
    %c0_2 = arith.constant 0 : index
    %c0_3 = arith.constant 0 : index
    %4 = vector.load %arg4[%c0_2, %c0_3] : memref<64x256xbf16, #tpu.memory_space<vmem>>, vector<64x256xbf16>
    %cst = arith.constant dense<0.000000e+00> : vector<16x256xf32>
    %5 = tpu.matmul %3, %4, %cst {dimension_numbers = #tpu.dot_dimension_numbers<[1], [0], [0], [1], [0, 0, 1, 1], [], []>} : vector<16x64xbf16>, vector<64x256xbf16>, vector<16x256xf32> -> vector<16x256xf32>
    %6 = vector.extract_strided_slice %5 {offsets = [0, 0], sizes = [16, 128], strides = [1, 1]} : vector<16x256xf32> to vector<16x128xf32>
    %7 = vector.extract_strided_slice %5 {offsets = [0, 128], sizes = [16, 128], strides = [1, 1]} : vector<16x256xf32> to vector<16x128xf32>
    %8 = arith.negf %6 : vector<16x128xf32>
    %9 = math.exp %8 : vector<16x128xf32>
    %cst_4 = arith.constant 1.000000e+00 : f32
    %10 = vector.broadcast %cst_4 : f32 to vector<16x128xf32>
    %11 = arith.addf %10, %9 : vector<16x128xf32>
    %12 = arith.divf %10, %11 : vector<16x128xf32>
    %13 = arith.mulf %6, %12 : vector<16x128xf32>
    %14 = arith.mulf %13, %7 : vector<16x128xf32>
    %c0_5 = arith.constant 0 : index
    %c0_6 = arith.constant 0 : index
    %15 = vector.load %arg7[%c0_5, %c0_6] : memref<16x64xf32, #tpu.memory_space<vmem>>, vector<16x64xf32>
    %16 = arith.truncf %14 : vector<16x128xf32> to vector<16x128xbf16>
    %c0_7 = arith.constant 0 : index
    %c0_8 = arith.constant 0 : index
    %17 = vector.load %arg5[%c0_7, %c0_8] : memref<128x64xbf16, #tpu.memory_space<vmem>>, vector<128x64xbf16>
    %cst_9 = arith.constant dense<0.000000e+00> : vector<16x64xf32>
    %18 = tpu.matmul %16, %17, %cst_9 {dimension_numbers = #tpu.dot_dimension_numbers<[1], [0], [0], [1], [0, 0, 1, 1], [], []>} : vector<16x128xbf16>, vector<128x64xbf16>, vector<16x64xf32> -> vector<16x64xf32>
    %19 = arith.addf %15, %18 : vector<16x64xf32>
    %c0_10 = arith.constant 0 : index
    %c0_11 = arith.constant 0 : index
    %20 = vector.load %arg7[%c0_10, %c0_11] : memref<16x64xf32, #tpu.memory_space<vmem>>, vector<16x64xf32>
    tpu.vector_store %arg7[%c0_10, %c0_11], %19 {strides = array<i32>} : memref<16x64xf32, #tpu.memory_space<vmem>>, vector<16x64xf32>,
    %c1_i32 = arith.constant 1 : i32
    %21 = arith.cmpi eq, %arg2, %c1_i32 : i32
    %22 = arith.extui %21 : i1 to i32
    %c0_i32_12 = arith.constant 0 : i32
    %23 = arith.cmpi ne, %22, %c0_i32_12 : i32
    scf.if %23 {
      %c0_13 = arith.constant 0 : index
      %c0_14 = arith.constant 0 : index
      %24 = vector.load %arg7[%c0_13, %c0_14] : memref<16x64xf32, #tpu.memory_space<vmem>>, vector<16x64xf32>
      %25 = arith.truncf %24 : vector<16x64xf32> to vector<16x64xbf16>
      %c0_15 = arith.constant 0 : index
      %c0_16 = arith.constant 0 : index
      %26 = vector.load %arg6[%c0_15, %c0_16] : memref<16x64xbf16, #tpu.memory_space<vmem>>, vector<16x64xbf16>
      tpu.vector_store %arg6[%c0_15, %c0_16], %25 {strides = array<i32>} : memref<16x64xbf16, #tpu.memory_space<vmem>>, vector<16x64xbf16>,
    } else {
    }
    return
  }
  func.func @transform_0(%arg0: i32, %arg1: i32, %arg2: i32) -> (i32, i32) {
    %c0_i32 = arith.constant 0 : i32
    %c0_i32_0 = arith.constant 0 : i32
    return %arg1, %c0_i32 : i32, i32
  }
  func.func @transform_1(%arg0: i32, %arg1: i32, %arg2: i32) -> (i32, i32) {
    %c2_i32 = arith.constant 2 : i32
    %0 = arith.muli %arg0, %c2_i32 : i32
    %1 = arith.addi %0, %arg2 : i32
    %c0_i32 = arith.constant 0 : i32
    %c0_i32_0 = arith.constant 0 : i32
    return %c0_i32, %1 : i32, i32
  }
  func.func @transform_2(%arg0: i32, %arg1: i32, %arg2: i32) -> (i32, i32) {
    %c2_i32 = arith.constant 2 : i32
    %0 = arith.muli %arg0, %c2_i32 : i32
    %1 = arith.addi %0, %arg2 : i32
    %c0_i32 = arith.constant 0 : i32
    %c0_i32_0 = arith.constant 0 : i32
    return %1, %c0_i32 : i32, i32
  }
  func.func @transform_3(%arg0: i32, %arg1: i32, %arg2: i32) -> (i32, i32) {
    %c3_i32 = arith.constant 3 : i32
    %0 = arith.muli %arg0, %c3_i32 : i32
    %1 = arith.addi %0, %arg1 : i32
    %c0_i32 = arith.constant 0 : i32
    %c0_i32_0 = arith.constant 0 : i32
    return %1, %c0_i32 : i32, i32
  }
}

</mosaic_0001>

<llo_original>
// kernel: tpu_custom_call.1
$region0: #{tpu_custom_call.1}
  #allocation0 [shape = 'u32[]', space=smem, size = 0x4, offset = 0x4, fixed_abs, tag = 'smem constant byte address 0x4 - core index']
  #allocation1 [shape = 'u32[72,128]{1,0:T(1,128)}', space=vmem, size = 0x9000, scoped, tag = 'internal scratch']
  #allocation2 [shape = 'f32[16,64]{1,0:T(8,128)}', space=vmem, size = 0x2000, scoped, tag = 'scratch operand']
  %s0 = inlined_call_operand.vmem [shape: bf16[48,64], index: 0, kind: input, shape index: {}]
  %s1 = inlined_call_operand.vmem [shape: bf16[64,512], index: 1, kind: input, shape index: {}]
  %s2 = inlined_call_operand.vmem [shape: bf16[256,64], index: 2, kind: input, shape index: {}]
  %s3 = inlined_call_operand.hbm [shape: bf16[48,64], index: 3, kind: output, shape index: {}]
  %s4 = sld [smem:[#allocation0]]
  $region91: #{tpu_custom_call.1} parent=0
    _
  %s6 = ssub.s32 1, %s4
  %s7 = scalar_select 0, %s6, %s4
  $region1: #{tpu_custom_call.1} parent=0
    #allocation3 [shape = 'u8[65536]{0}', space=vmem, size = 0x10000, scoped, tag = 'input window, operand 1']
    #allocation4 [shape = 'u8[8192]{0}', space=vmem, size = 0x2000, scoped, tag = 'output window, operand 0']
    #allocation5 [shape = 's32[2]{0}', space=sflag, size = 0x8, scoped, tag = 'scoped memory for tpu_custom_call.1']
    %8 = vsyncpa [#allocation5], 0
    %s9 = scalar_lea.sflag [#allocation5], 1
    %10 = vsyncpa %s9, 0
    loop: start=0, step=1, limit=8
    $region2: #{tpu_custom_call.1} parent=1 // loop_pre_header
      _
    $region3: #{tpu_custom_call.1} parent=1 // loop_header
      %s12 = sphi 0, %s16
      %p13 = scmp.ge.s32.totalorder %s12, 8
      %s19 = sphi 0, %s38
      %s20 = sphi 0, %s34
      %s21 = sphi 0, %s30
      %s22 = sphi 0, %s19
      %s23 = sphi 0, %s20
      %s24 = sphi 0, %s21
      %s25 = sphi 0, %s22
      %s26 = sphi 0, %s23
      %s27 = sphi 0, %s24
      %s41 = sphi 0, %s43
      %s44 = sphi 0, %s41
      %s45 = sphi 0, %s44
      %s61 = sphi 0, %s45
      %s71 = sphi 0, %s73
      %s74 = sphi 0, %s71
      %s75 = sphi 0, %s74
      %s91 = sphi 0, %s75
      %s101 = sphi 0, %s103
      %s104 = sphi 0, %s101
      %s105 = sphi 0, %s104
      %s121 = sphi 0, %s105
      %s131 = sphi 0, %s133
      %s134 = sphi 0, %s131
      %s135 = sphi 0, %s134
      %s151 = sphi 0, %s135
    $region4: #{tpu_custom_call.1} parent=1 // loop_header_branch
      %15 = sbr.rel (%p13) target = $region8
    $region5: #{tpu_custom_call.1} parent=1 // loop_body
      %s17 = ssub.s32 %s12, 1
      %s18 = ssub.s32 %s12, 2
      %s28 = sadd.s32 1, %s21
      %p29 = scmp.ge.s32.totalorder %s28, 2
      %s30 = scalar_select %p29, 0, %s28
      %s31 = sadd.s32 1, %s20
      %s32 = scalar_select %p29, %s31, %s20
      %p33 = scmp.ge.s32.totalorder %s32, 3
      %s34 = scalar_select %p33, 0, %s32
      %s35 = sadd.s32 1, %s19
      %s36 = scalar_select %p33, %s35, %s19
      %p37 = scmp.ge.s32.totalorder %s36, 1
      %s38 = scalar_select %p37, 0, %s36
      %s39 = ssub.s32 %s20, %s34
      %p40 = scmp.eq.s32.totalorder %s39, 0
      %s42 = sadd.s32 %s41, 1
      %s43 = scalar_select %p40, %s41, %s42
      %p46 = pneg %p40
      %p47 = scmp.eq.s32.totalorder %s12, 5
      %p48 = por %p46, %p47
      %p49 = scmp.ne.s32.totalorder %s41, %s44
      %p50 = scmp.eq.s32.totalorder %s12, 0
      %p51 = por %p49, %p50
      %p52 = scmp.ne.s32.totalorder %s41, %s44
      %p53 = scmp.eq.s32.totalorder %s17, 5
      %p54 = por %p52, %p53
      %p55 = scmp.ne.s32.totalorder %s44, %s45
      %p56 = scmp.eq.s32.totalorder %s17, 0
      %p57 = por %p55, %p56
      %p58 = scmp.ne.s32.totalorder %s44, %s45
      %p59 = scmp.eq.s32.totalorder %s18, 5
      %p60 = por %p58, %p59
      %p62 = scmp.ne.s32.totalorder %s45, %s61
      %p63 = scmp.eq.s32.totalorder %s18, 0
      %p64 = por %p62, %p63
      %s65 = smul.u32 %s19, 2
      %s66 = sadd.s32 %s65, %s21
      %s67 = smul.u32 %s38, 2
      %s68 = sadd.s32 %s67, %s30
      %s69 = ssub.s32 %s66, %s68
      %p70 = scmp.eq.s32.totalorder %s69, 0
      %s72 = sadd.s32 %s71, 1
      %s73 = scalar_select %p70, %s71, %s72
      %p76 = pneg %p70
      %p77 = scmp.eq.s32.totalorder %s12, 5
      %p78 = por %p76, %p77
      %p79 = scmp.ne.s32.totalorder %s71, %s74
      %p80 = scmp.eq.s32.totalorder %s12, 0
      %p81 = por %p79, %p80
      %p82 = scmp.ne.s32.totalorder %s71, %s74
      %p83 = scmp.eq.s32.totalorder %s17, 5
      %p84 = por %p82, %p83
      %p85 = scmp.ne.s32.totalorder %s74, %s75
      %p86 = scmp.eq.s32.totalorder %s17, 0
      %p87 = por %p85, %p86
      %p88 = scmp.ne.s32.totalorder %s74, %s75
      %p89 = scmp.eq.s32.totalorder %s18, 5
      %p90 = por %p88, %p89
      %p92 = scmp.ne.s32.totalorder %s75, %s91
      %p93 = scmp.eq.s32.totalorder %s18, 0
      %p94 = por %p92, %p93
      %s95 = smul.u32 %s19, 2
      %s96 = sadd.s32 %s95, %s21
      %s97 = smul.u32 %s38, 2
      %s98 = sadd.s32 %s97, %s30
      %s99 = ssub.s32 %s96, %s98
      %p100 = scmp.eq.s32.totalorder %s99, 0
      %s102 = sadd.s32 %s101, 1
      %s103 = scalar_select %p100, %s101, %s102
      %p106 = pneg %p100
      %p107 = scmp.eq.s32.totalorder %s12, 5
      %p108 = por %p106, %p107
      %p109 = scmp.ne.s32.totalorder %s101, %s104
      %p110 = scmp.eq.s32.totalorder %s12, 0
      %p111 = por %p109, %p110
      %p112 = scmp.ne.s32.totalorder %s101, %s104
      %p113 = scmp.eq.s32.totalorder %s17, 5
      %p114 = por %p112, %p113
      %p115 = scmp.ne.s32.totalorder %s104, %s105
      %p116 = scmp.eq.s32.totalorder %s17, 0
      %p117 = por %p115, %p116
      %p118 = scmp.ne.s32.totalorder %s104, %s105
      %p119 = scmp.eq.s32.totalorder %s18, 5
      %p120 = por %p118, %p119
      %p122 = scmp.ne.s32.totalorder %s105, %s121
      %p123 = scmp.eq.s32.totalorder %s18, 0
      %p124 = por %p122, %p123
      %s125 = smul.u32 %s19, 3
      %s126 = sadd.s32 %s125, %s20
      %s127 = smul.u32 %s38, 3
      %s128 = sadd.s32 %s127, %s34
      %s129 = ssub.s32 %s126, %s128
      %p130 = scmp.eq.s32.totalorder %s129, 0
      %s132 = sadd.s32 %s131, 1
      %s133 = scalar_select %p130, %s131, %s132
      %p136 = pneg %p130
      %p137 = scmp.eq.s32.totalorder %s12, 5
      %p138 = por %p136, %p137
      %p139 = scmp.ne.s32.totalorder %s131, %s134
      %p140 = scmp.eq.s32.totalorder %s12, 0
      %p141 = por %p139, %p140
      %p142 = scmp.ne.s32.totalorder %s131, %s134
      %p143 = scmp.eq.s32.totalorder %s17, 5
      %p144 = por %p142, %p143
      %p145 = scmp.ne.s32.totalorder %s134, %s135
      %p146 = scmp.eq.s32.totalorder %s17, 0
      %p147 = por %p145, %p146
      %p148 = scmp.ne.s32.totalorder %s134, %s135
      %p149 = scmp.eq.s32.totalorder %s18, 5
      %p150 = por %p148, %p149
      %p152 = scmp.ne.s32.totalorder %s135, %s151
      %p153 = scmp.eq.s32.totalorder %s18, 0
      %p154 = por %p152, %p153
      %p155 = scmp.le.s32.totalorder 1, %s12
      %p156 = scmp.lt.s32.totalorder %s12, 7
      %p157 = pnand %p155, %p156
      %p158 = pneg %p157
      // Predicated region
      $region9: #{tpu_custom_call.1} parent=5 // pred_check
        _
      $region10: #{tpu_custom_call.1} parent=5 // pred_check_branch
        %160 = sbr.rel (%p157) target = $region12
      $region11: #{tpu_custom_call.1} parent=5 // pred_region
        %s161 = ssub.s32 %s12, 1
      $region12: #{tpu_custom_call.1} parent=5 // pred_fallthru
        _
      %p162 = scmp.lt.s32.totalorder %s12, 6
      // Predicated region
      $region13: #{tpu_custom_call.1} parent=5 // pred_check
        %p163 = pneg %p162
      $region14: #{tpu_custom_call.1} parent=5 // pred_check_branch
        %165 = sbr.rel (%p163) target = $region16
      $region15: #{tpu_custom_call.1} parent=5 // pred_region
        // Predicated region
        $region17: #{tpu_custom_call.1} parent=15 // pred_check
          %p166 = pneg %p51
        $region18: #{tpu_custom_call.1} parent=15 // pred_check_branch
          %168 = sbr.rel (%p166) target = $region20
        $region19: #{tpu_custom_call.1} parent=15 // pred_region
          %s169 = smul.u32 2, %s20
          %p170 = scmp.lt.s32.totalorder %s169, 5
          %s171 = scalar_select %p170, %s169, 5
          %s172 = smul.addr %s171, 4
          %s173 = scalar_lea.vmem %s0, %s172
          %s174 = smul.u32 2, %s20
        $region20: #{tpu_custom_call.1} parent=15 // pred_fallthru
          _
        // Predicated region
        $region21: #{tpu_custom_call.1} parent=15 // pred_check
          %p175 = pneg %p81
        $region22: #{tpu_custom_call.1} parent=15 // pred_check_branch
          %177 = sbr.rel (%p175) target = $region24
        $region23: #{tpu_custom_call.1} parent=15 // pred_region
          %s178 = sand.u32 %s71, 1
          %s179 = sand.u32 %s71, 1
          %s180 = smul.addr %s179, 64
          %s181 = scalar_lea.vmem [#allocation3], %s180
          %s182 = smul.u32 %s19, 2
          %s183 = sadd.s32 %s182, %s21
          %s184 = smul.u32 2, %s183
          %s185 = smul.addr %s184, 4
          %s186 = scalar_lea.vmem %s1, %s185
          // Predicated region
          $region25: #{tpu_custom_call.1} parent=23 // pred_check
            _
          $region26: #{tpu_custom_call.1} parent=23 // pred_check_branch
            %188 = sbr.rel (0) target = $region28
          $region27: #{tpu_custom_call.1} parent=23 // pred_region
            // Predicated region
            $region29: #{tpu_custom_call.1} parent=27 // pred_check
              _
            $region30: #{tpu_custom_call.1} parent=27 // pred_check_branch
              %190 = sbr.rel (0) target = $region32
            $region31: #{tpu_custom_call.1} parent=27 // pred_region
              // Predicated region
              $region44: #{tpu_custom_call.1} parent=31 // pred_check
                _
              $region45: #{tpu_custom_call.1} parent=31 // pred_check_branch
                %220 = sbr.rel (0) target = $region47
              $region46: #{tpu_custom_call.1} parent=31 // pred_region
                loop: start=0, step=1, limit=1
                $region48: #{tpu_custom_call.1} parent=46 // loop_pre_header
                  _
                $region49: #{tpu_custom_call.1} parent=46 // loop_header
                  %s222 = sphi 0, %s226
                  %p223 = scmp.ge.s32.totalorder %s222, 1
                  %s227 = sphi %s186, %s186
                  %s228 = sphi %s181, %s181
                $region50: #{tpu_custom_call.1} parent=46 // loop_header_branch
                  %225 = sbr.rel (%p223) target = $region54
                $region51: #{tpu_custom_call.1} parent=46 // loop_body
                  %v229 = vld [vmem:[%s227] sm:$0xff]
                  %230 = vst [vmem:[%s228] sm:$0xff] %v229
                  %v231 = vld [vmem:[%s227 + $0x10] sm:$0xff]
                  %232 = vst [vmem:[%s228 + $0x8] sm:$0xff] %v231
                  %v233 = vld [vmem:[%s227 + $0x20] sm:$0xff]
                  %234 = vst [vmem:[%s228 + $0x10] sm:$0xff] %v233
                  %v235 = vld [vmem:[%s227 + $0x30] sm:$0xff]
                  %236 = vst [vmem:[%s228 + $0x18] sm:$0xff] %v235
                  %v237 = vld [vmem:[%s227 + $0x40] sm:$0xff]
                  %238 = vst [vmem:[%s228 + $0x20] sm:$0xff] %v237
                  %v239 = vld [vmem:[%s227 + $0x50] sm:$0xff]
                  %240 = vst [vmem:[%s228 + $0x28] sm:$0xff] %v239
                  %v241 = vld [vmem:[%s227 + $0x60] sm:$0xff]
                  %242 = vst [vmem:[%s228 + $0x30] sm:$0xff] %v241
                  %v243 = vld [vmem:[%s227 + $0x70] sm:$0xff]
                  %244 = vst [vmem:[%s228 + $0x38] sm:$0xff] %v243
                $region52: #{tpu_custom_call.1} parent=46 // loop_footer
                  %s226 = sadd.s32 1, %s222
                $region53: #{tpu_custom_call.1} parent=46 // loop_footer_branch
                  %221 = sbr.rel target = $region49
                $region54: #{tpu_custom_call.1} parent=46 // loop_exit
                  _
              $region47: #{tpu_custom_call.1} parent=31 // pred_fallthru
                _
              // Predicated region
              $region55: #{tpu_custom_call.1} parent=31 // pred_check
                _
              $region56: #{tpu_custom_call.1} parent=31 // pred_check_branch
                %246 = sbr.rel target = $region58
              $region57: #{tpu_custom_call.1} parent=31 // pred_region
                _
              $region58: #{tpu_custom_call.1} parent=31 // pred_fallthru
                _
            $region32: #{tpu_custom_call.1} parent=27 // pred_fallthru
              _
            // Predicated region
            $region33: #{tpu_custom_call.1} parent=27 // pred_check
              _
            $region34: #{tpu_custom_call.1} parent=27 // pred_check_branch
              %192 = sbr.rel target = $region36
            $region35: #{tpu_custom_call.1} parent=27 // pred_region
              %s194 = ssub.s32 256, 1
              loop: start=0, step=1, limit=1
              $region37: #{tpu_custom_call.1} parent=35 // loop_pre_header
                _
              $region38: #{tpu_custom_call.1} parent=35 // loop_header
                %s196 = sphi 0, %s200
                %p197 = scmp.ge.s32.totalorder %s196, 1
                %s201 = sphi %s186, %s186
                %s202 = sphi %s181, %s181
              $region39: #{tpu_custom_call.1} parent=35 // loop_header_branch
                %199 = sbr.rel (%p197) target = $region43
              $region40: #{tpu_custom_call.1} parent=35 // loop_body
                %v203 = vld [vmem:[%s201] sm:%s194]
                %204 = vst [vmem:[%s202] sm:%s194] %v203
                %v205 = vld [vmem:[%s201 + $0x10] sm:%s194]
                %206 = vst [vmem:[%s202 + $0x8] sm:%s194] %v205
                %v207 = vld [vmem:[%s201 + $0x20] sm:%s194]
                %208 = vst [vmem:[%s202 + $0x10] sm:%s194] %v207
                %v209 = vld [vmem:[%s201 + $0x30] sm:%s194]
                %210 = vst [vmem:[%s202 + $0x18] sm:%s194] %v209
                %v211 = vld [vmem:[%s201 + $0x40] sm:%s194]
                %212 = vst [vmem:[%s202 + $0x20] sm:%s194] %v211
                %v213 = vld [vmem:[%s201 + $0x50] sm:%s194]
                %214 = vst [vmem:[%s202 + $0x28] sm:%s194] %v213
                %v215 = vld [vmem:[%s201 + $0x60] sm:%s194]
                %216 = vst [vmem:[%s202 + $0x30] sm:%s194] %v215
                %v217 = vld [vmem:[%s201 + $0x70] sm:%s194]
                %218 = vst [vmem:[%s202 + $0x38] sm:%s194] %v217
              $region41: #{tpu_custom_call.1} parent=35 // loop_footer
                %s200 = sadd.s32 1, %s196
              $region42: #{tpu_custom_call.1} parent=35 // loop_footer_branch
                %195 = sbr.rel target = $region38
              $region43: #{tpu_custom_call.1} parent=35 // loop_exit
                _
            $region36: #{tpu_custom_call.1} parent=27 // pred_fallthru
              _
          $region28: #{tpu_custom_call.1} parent=23 // pred_fallthru
            _
          %247 = vnop
        $region24: #{tpu_custom_call.1} parent=15 // pred_fallthru
          _
        // Predicated region
        $region59: #{tpu_custom_call.1} parent=15 // pred_check
          %p248 = pneg %p111
        $region60: #{tpu_custom_call.1} parent=15 // pred_check_branch
          %250 = sbr.rel (%p248) target = $region62
        $region61: #{tpu_custom_call.1} parent=15 // pred_region
          %s251 = smul.u32 %s19, 2
          %s252 = sadd.s32 %s251, %s21
          %s253 = smul.u32 16, %s252
          %p254 = scmp.lt.s32.totalorder %s253, 31
          %s255 = scalar_select %p254, %s253, 31
          %s256 = smul.addr %s255, 4
          %s257 = scalar_lea.vmem %s2, %s256
          %s258 = smul.u32 %s19, 2
          %s259 = sadd.s32 %s258, %s21
          %s260 = smul.u32 16, %s259
        $region62: #{tpu_custom_call.1} parent=15 // pred_fallthru
          _
      $region16: #{tpu_custom_call.1} parent=5 // pred_fallthru
        _
      %p261 = scmp.le.s32.totalorder 1, %s12
      %p262 = scmp.lt.s32.totalorder %s12, 7
      %p263 = pnand %p261, %p262
      %p264 = pneg %p263
      // Predicated region
      $region63: #{tpu_custom_call.1} parent=5 // pred_check
        _
      $region64: #{tpu_custom_call.1} parent=5 // pred_check_branch
        %266 = sbr.rel (%p263) target = $region66
      $region65: #{tpu_custom_call.1} parent=5 // pred_region
        %s267 = ssub.s32 %s12, 1
        %s268 = sand.u32 %s74, 1
        %s269 = sand.u32 %s74, 1
        %s270 = smul.addr %s269, 64
        %s271 = scalar_lea.vmem [#allocation3], %s270
        // Predicated region
        $region67: #{tpu_custom_call.1} parent=65 // pred_check
          %p272 = pneg %p87
        $region68: #{tpu_custom_call.1} parent=65 // pred_check_branch
          %274 = sbr.rel (%p272) target = $region70
        $region69: #{tpu_custom_call.1} parent=65 // pred_region
          _
        $region70: #{tpu_custom_call.1} parent=65 // pred_fallthru
          _
        %s275 = smul.u32 2, %s23
        %p276 = scmp.lt.s32.totalorder %s275, 5
        %s277 = scalar_select %p276, %s275, 5
        %s278 = smul.addr %s277, 4
        %s279 = scalar_lea.vmem %s0, %s278
        %p280 = pneg %p57
        %p281 = pneg %p54
        %s282 = sand.u32 %s74, 1
        %s283 = sand.u32 %s74, 1
        %s284 = smul.addr %s283, 64
        %s285 = scalar_lea.vmem [#allocation3], %s284
        %p286 = pneg %p87
        %p287 = pneg %p84
        %s288 = smul.u32 %s22, 2
        %s289 = sadd.s32 %s288, %s24
        %s290 = smul.u32 16, %s289
        %p291 = scmp.lt.s32.totalorder %s290, 31
        %s292 = scalar_select %p291, %s290, 31
        %s293 = smul.addr %s292, 4
        %s294 = scalar_lea.vmem %s2, %s293
        %p295 = pneg %p117
        %p296 = pneg %p114
        %p297 = pneg %p147
        %p298 = pneg %p144
        %s299 = sand.u32 %s134, 1
        %s300 = scalar_lea.sflag [#allocation5], %s299
        %s301 = sand.u32 %s134, 1
        %s302 = smul.addr %s301, 8
        %s303 = scalar_lea.vmem [#allocation4], %s302
        %s304 = smul.u32 2, %s23
        %p305 = scmp.lt.s32.totalorder %s304, 5
        %s306 = scalar_select %p305, %s304, 5
        %s307 = smul.addr %s306, 4
        %s308 = scalar_lea.vmem %s0, %s307
        %s309 = smul.u32 2, %s23
        %s310 = smul.u32 %s22, 2
        %s311 = sadd.s32 %s310, %s24
        %s312 = smul.u32 2, %s311
        %s313 = smul.u32 %s22, 2
        %s314 = sadd.s32 %s313, %s24
        %s315 = smul.u32 16, %s314
        %p316 = scmp.lt.s32.totalorder %s315, 31
        %s317 = scalar_select %p316, %s315, 31
        %s318 = smul.addr %s317, 4
        %s319 = scalar_lea.vmem %s2, %s318
        %s320 = smul.u32 %s22, 2
        %s321 = sadd.s32 %s320, %s24
        %s322 = smul.u32 16, %s321
        %s323 = smul.u32 %s22, 3
        %s324 = sadd.s32 %s323, %s23
        %s325 = smul.u32 2, %s324
        %p327 = scmp.eq.s32.totalorder %s24, 0
        // Predicated region
        $region71: #{tpu_custom_call.1} parent=65 // pred_check
          %p328 = pneg %p327
        $region72: #{tpu_custom_call.1} parent=65 // pred_check_branch
          %330 = sbr.rel (%p328) target = $region74
        $region73: #{tpu_custom_call.1} parent=65 // pred_region
          %vm331 = vcmask 523264
          %332 = vst.msk [vmem:[#allocation2] sm:$0xff] %vm331, 0.0
          %333 = vst.msk [vmem:[#allocation2 + $0x8] sm:$0xff] %vm331, 0.0
        $region74: #{tpu_custom_call.1} parent=65 // pred_fallthru
          _
        %v334 = vld [vmem:[%s308] sm:$0xf]
        %v335 = vld [vmem:[%s308 + $0x4] sm:$0xf]
        %v336 = vld [vmem:[%s271] sm:$0xff]
        %v337 = vld [vmem:[%s271 + $0x8] sm:$0xff]
        %v338 = vld [vmem:[%s271 + $0x10] sm:$0xff]
        %v339 = vld [vmem:[%s271 + $0x18] sm:$0xff]
        %v340 = vld [vmem:[%s271 + $0x20] sm:$0xff]
        %v341 = vld [vmem:[%s271 + $0x28] sm:$0xff]
        %v342 = vld [vmem:[%s271 + $0x30] sm:$0xff]
        %v343 = vld [vmem:[%s271 + $0x38] sm:$0xff]
        %v346 = vunpack.c.l.b16 %v334
        %v347 = vunpack.c.l.b16 %v335
        %v348 = vpack.c.b16 %v347, %v346
        %v357 = vunpack.c.l.b16 %v336
        %v358 = vunpack.c.h.b16 %v336
        %v359 = vunpack.c.l.b16 %v337
        %v360 = vunpack.c.h.b16 %v337
        %v361 = vunpack.c.l.b16 %v338
        %v362 = vunpack.c.h.b16 %v338
        %v363 = vunpack.c.l.b16 %v339
        %v364 = vunpack.c.h.b16 %v339
        %v365 = vunpack.c.l.b16 %v340
        %v366 = vunpack.c.h.b16 %v340
        %v367 = vunpack.c.l.b16 %v341
        %v368 = vunpack.c.h.b16 %v341
        %v369 = vunpack.c.l.b16 %v342
        %v370 = vunpack.c.h.b16 %v342
        %v371 = vunpack.c.l.b16 %v343
        %v372 = vunpack.c.h.b16 %v343
        %v373 = vpack.c.b16 %v359, %v357
        %v374 = vpack.c.b16 %v360, %v358
        %v375 = vpack.c.b16 %v363, %v361
        %v376 = vpack.c.b16 %v364, %v362
        %v377 = vpack.c.b16 %v367, %v365
        %v378 = vpack.c.b16 %v368, %v366
        %v379 = vpack.c.b16 %v371, %v369
        %v380 = vpack.c.b16 %v372, %v370
        %vm389 = vcmask 523264
        %v391 = vsel %vm389, %v348, 0
        %393 = vmatpush.bf16.msra.mxu0 0
        %394 = vmatpush.bf16.msra.mxu0 0
        %395 = vmatpush.bf16.msra.mxu0 0
        %396 = vmatpush.bf16.msra.mxu0 0
        %397 = vmatpush.bf16.msra.mxu0 %v379
        %398 = vmatpush.bf16.msra.mxu0 %v377
        %399 = vmatpush.bf16.msra.mxu0 %v375
        %400 = vmatpush.bf16.msra.mxu0 %v373
        %401 = vmatmul.bf16.gmra.mxu0 %v391
        %v402 = vpop.f32.mrf.mxu0
        %v403 = vadd.f32 0.0, %v402
        %v404 = vpop.f32.mrf.mxu0
        %v405 = vadd.f32 0.0, %v404
        %406 = vdwg.mxu0
        %407 = vmatpush.bf16.msra.mxu0 0
        %408 = vmatpush.bf16.msra.mxu0 0
        %409 = vmatpush.bf16.msra.mxu0 0
        %410 = vmatpush.bf16.msra.mxu0 0
        %411 = vmatpush.bf16.msra.mxu0 %v380
        %412 = vmatpush.bf16.msra.mxu0 %v378
        %413 = vmatpush.bf16.msra.mxu0 %v376
        %414 = vmatpush.bf16.msra.mxu0 %v374
        %415 = vmatmul.bf16.gmra.mxu0 %v391
        %v416 = vpop.f32.mrf.mxu0
        %v417 = vadd.f32 0.0, %v416
        %v418 = vpop.f32.mrf.mxu0
        %v419 = vadd.f32 0.0, %v418
        %420 = vdwg.mxu0
        %v421 = vxor.u32 %v403, 2147483648
        %v422 = vxor.u32 %v405, 2147483648
        %v423 = vmul.f32 %v421, 1.442695
        %v424 = vpow.pop %v423
        %v425 = vmul.f32 %v422, 1.442695
        %v426 = vpow.pop %v425
        %v427 = vadd.f32 %v424, 1.0
        %v428 = vadd.f32 %v426, 1.0
        %v429 = vrcp.pop %v427
        %v430 = vmul.f32 %v427, %v429
        %v431 = vsub.f32 1.0, %v430
        %v432 = vmul.f32 %v429, %v431
        %v433 = vadd.f32 %v429, %v432
        %vm434 = vweird.f32 %v427
        %vm435 = vweird.f32 %v429
        %vm436 = vmor %vm434, %vm435
        %v437 = vsel %vm436, %v429, %v433
        %v438 = vand.u32 2147483647, %v427
        %vm439 = vcmp.eq.f32.partialorder %v438, 8.507059e+37
        %v440 = vand.u32 %v427, 2147483648
        %v441 = vor.u32 1.1754944e-38, %v440
        %v442 = vsel %vm439, %v441, %v437
        %v443 = vmul.f32 1.0, %v442
        %v444 = vrcp.pop %v428
        %v445 = vmul.f32 %v428, %v444
        %v446 = vsub.f32 1.0, %v445
        %v447 = vmul.f32 %v444, %v446
        %v448 = vadd.f32 %v444, %v447
        %vm449 = vweird.f32 %v428
        %vm450 = vweird.f32 %v444
        %vm451 = vmor %vm449, %vm450
        %v452 = vsel %vm451, %v444, %v448
        %v453 = vand.u32 2147483647, %v428
        %vm454 = vcmp.eq.f32.partialorder %v453, 8.507059e+37
        %v455 = vand.u32 %v428, 2147483648
        %v456 = vor.u32 1.1754944e-38, %v455
        %v457 = vsel %vm454, %v456, %v452
        %v458 = vmul.f32 1.0, %v457
        %v459 = vmul.f32 %v403, %v443
        %v460 = vmul.f32 %v405, %v458
        %v461 = vmul.f32 %v459, %v417
        %v462 = vmul.f32 %v460, %v419
        %v463 = vld [vmem:[#allocation2] sm:$0xff]
        %v464 = vld [vmem:[#allocation2 + $0x8] sm:$0xff]
        %v465 = vpack.c.bf16 %v462, %v461
        %v466 = vld [vmem:[%s319] sm:$0xf]
        %v467 = vld [vmem:[%s319 + $0x4] sm:$0xf]
        %v468 = vld [vmem:[%s319 + $0x8] sm:$0xf]
        %v469 = vld [vmem:[%s319 + $0xc] sm:$0xf]
        %v470 = vld [vmem:[%s319 + $0x10] sm:$0xf]
        %v471 = vld [vmem:[%s319 + $0x14] sm:$0xf]
        %v472 = vld [vmem:[%s319 + $0x18] sm:$0xf]
        %v473 = vld [vmem:[%s319 + $0x1c] sm:$0xf]
        %v474 = vld [vmem:[%s319 + $0x20] sm:$0xf]
        %v475 = vld [vmem:[%s319 + $0x24] sm:$0xf]
        %v476 = vld [vmem:[%s319 + $0x28] sm:$0xf]
        %v477 = vld [vmem:[%s319 + $0x2c] sm:$0xf]
        %v478 = vld [vmem:[%s319 + $0x30] sm:$0xf]
        %v479 = vld [vmem:[%s319 + $0x34] sm:$0xf]
        %v480 = vld [vmem:[%s319 + $0x38] sm:$0xf]
        %v481 = vld [vmem:[%s319 + $0x3c] sm:$0xf]
        %v498 = vunpack.c.l.b16 %v466
        %v499 = vunpack.c.l.b16 %v467
        %v500 = vunpack.c.l.b16 %v468
        %v501 = vunpack.c.l.b16 %v469
        %v502 = vunpack.c.l.b16 %v470
        %v503 = vunpack.c.l.b16 %v471
        %v504 = vunpack.c.l.b16 %v472
        %v505 = vunpack.c.l.b16 %v473
        %v506 = vunpack.c.l.b16 %v474
        %v507 = vunpack.c.l.b16 %v475
        %v508 = vunpack.c.l.b16 %v476
        %v509 = vunpack.c.l.b16 %v477
        %v510 = vunpack.c.l.b16 %v478
        %v511 = vunpack.c.l.b16 %v479
        %v512 = vunpack.c.l.b16 %v480
        %v513 = vunpack.c.l.b16 %v481
        %v514 = vpack.c.b16 %v499, %v498
        %v515 = vpack.c.b16 %v501, %v500
        %v516 = vpack.c.b16 %v503, %v502
        %v517 = vpack.c.b16 %v505, %v504
        %v518 = vpack.c.b16 %v507, %v506
        %v519 = vpack.c.b16 %v509, %v508
        %v520 = vpack.c.b16 %v511, %v510
        %v521 = vpack.c.b16 %v513, %v512
        %530 = vmatpush.bf16.msra.mxu0 %v521
        %531 = vmatpush.bf16.msra.mxu0 %v520
        %532 = vmatpush.bf16.msra.mxu0 %v519
        %533 = vmatpush.bf16.msra.mxu0 %v518
        %534 = vmatpush.bf16.msra.mxu0 %v517
        %535 = vmatpush.bf16.msra.mxu0 %v516
        %536 = vmatpush.bf16.msra.mxu0 %v515
        %537 = vmatpush.bf16.msra.mxu0 %v514
        %538 = vmatmul.bf16.gmra.mxu0 %v465
        %v539 = vpop.f32.mrf.mxu0
        %v540 = vadd.f32 0.0, %v539
        %v541 = vpop.f32.mrf.mxu0
        %v542 = vadd.f32 0.0, %v541
        %543 = vdwg.mxu0
        %v544 = vadd.f32 %v463, %v540
        %v545 = vadd.f32 %v464, %v542
        %546 = vst.msk [vmem:[#allocation2] sm:$0xff] %vm389, %v544
        %547 = vst.msk [vmem:[#allocation2 + $0x8] sm:$0xff] %vm389, %v545
        %p548 = scmp.eq.s32.totalorder %s24, 1
        // Predicated region
        $region75: #{tpu_custom_call.1} parent=65 // pred_check
          %p549 = pneg %p548
        $region76: #{tpu_custom_call.1} parent=65 // pred_check_branch
          %551 = sbr.rel (%p549) target = $region78
        $region77: #{tpu_custom_call.1} parent=65 // pred_region
          %v552 = vld [vmem:[#allocation2] sm:$0xff]
          %v553 = vld [vmem:[#allocation2 + $0x8] sm:$0xff]
          %v554 = vpack.c.bf16 %v552, %v552
          %v555 = vpack.c.bf16 %v553, %v553
          %vm556 = vcmask 519168
          %557 = vst.msk [vmem:[%s303] sm:$0xf] %vm556, %v554
          %558 = vst.msk [vmem:[%s303 + $0x4] sm:$0xf] %vm556, %v555
        $region78: #{tpu_custom_call.1} parent=65 // pred_fallthru
          _
        %s559 = sand.u32 %s134, 1
        %s560 = scalar_lea.sflag [#allocation5], %s559
        %s561 = sand.u32 %s134, 1
        %s562 = smul.addr %s561, 8
        %s563 = scalar_lea.vmem [#allocation4], %s562
        // Predicated region
        $region79: #{tpu_custom_call.1} parent=65 // pred_check
          %p564 = pneg %p144
        $region80: #{tpu_custom_call.1} parent=65 // pred_check_branch
          %566 = sbr.rel (%p564) target = $region82
        $region81: #{tpu_custom_call.1} parent=65 // pred_region
          %s567 = smul.u32 %s22, 3
          %s568 = sadd.s32 %s567, %s23
          %s569 = smul.u32 2, %s568
          %571 = vsyncadd %s560, 0
          %s572 = smul.addr %s569, 4
          %s573 = scalar_lea.hbm %s3, %s572
          %s574 = sshll.u32 %s563, 4
          %s575 = int_to_ptr.vmem [resolvable:$true] %s574
          %s576 = sshll.u32 %s573, 4
          %s577 = int_to_ptr.hbm [resolvable:$true] %s576
          %582 = dma.vmem_to_hbm [thread:$0]  %s575, 128, %s577, %s560, 64, 64, 4
        $region82: #{tpu_custom_call.1} parent=65 // pred_fallthru
          _
      $region66: #{tpu_custom_call.1} parent=5 // pred_fallthru
        _
      %p583 = scmp.le.s32.totalorder 2, %s12
      // Predicated region
      $region83: #{tpu_custom_call.1} parent=5 // pred_check
        %p584 = pneg %p583
      $region84: #{tpu_custom_call.1} parent=5 // pred_check_branch
        %586 = sbr.rel (%p584) target = $region86
      $region85: #{tpu_custom_call.1} parent=5 // pred_region
        %s587 = ssub.s32 %s12, 2
        // Predicated region
        $region87: #{tpu_custom_call.1} parent=85 // pred_check
          %p588 = pneg %p150
        $region88: #{tpu_custom_call.1} parent=85 // pred_check_branch
          %590 = sbr.rel (%p588) target = $region90
        $region89: #{tpu_custom_call.1} parent=85 // pred_region
          %s591 = sand.u32 %s135, 1
          %s592 = scalar_lea.sflag [#allocation5], %s591
          %s593 = sand.u32 %s135, 1
          %s594 = smul.addr %s593, 8
          %s595 = scalar_lea.vmem [#allocation4], %s594
          %597 = dma.done %s592, 128
        $region90: #{tpu_custom_call.1} parent=85 // pred_fallthru
          _
      $region86: #{tpu_custom_call.1} parent=5 // pred_fallthru
        _
    $region6: #{tpu_custom_call.1} parent=1 // loop_footer
      %s16 = sadd.s32 1, %s12
    $region7: #{tpu_custom_call.1} parent=1 // loop_footer_branch
      %11 = sbr.rel target = $region3
    $region8: #{tpu_custom_call.1} parent=1 // loop_exit
      _
    %598 = vsyncpa [#allocation5], 1
    %s599 = scalar_lea.sflag [#allocation5], 1
    %600 = vsyncpa %s599, 1

</llo_original>
